<compile_context>
chip_gen: v6e
topology: v6e:2x2x1
jax: 0.10.0
libtpu: 0.0.40
codegen_flags: <defaults>
</compile_context>

<pallas_src>
import functools

import jax
import jax.numpy as jnp
from jax.experimental import pallas as pl
from jax.experimental.pallas import tpu as pltpu


def _ln4d_kernel(x_ref, g_ref, b_ref, o_ref, *, eps: float, inv_c: float):
    # x_ref: (TB, C, T) -- channels on sublanes, spatial on lanes (lane-dense)
    # g_ref / b_ref: (1, C, 1)
    x = x_ref[...].astype(jnp.float32)

    # Fused moments: single pass over the tile, one pair of sublane reduces.
    s1 = jnp.sum(x, axis=1, keepdims=True)        # (TB, 1, T)
    s2 = jnp.sum(x * x, axis=1, keepdims=True)    # (TB, 1, T)
    mu = s1 * inv_c
    var = s2 * inv_c - mu * mu                    # E[x^2] - mu^2 (unbiased=False)
    var = jnp.maximum(var, 0.0)                   # guard tiny negative rounding
    inv_std = jax.lax.rsqrt(var + eps)            # EUP, (TB, 1, T)

    scale = inv_std * g_ref[...].astype(jnp.float32)   # gamma folded: (TB, C, T)
    shift = b_ref[...].astype(jnp.float32)              # (1, C, 1)
    o_ref[...] = ((x - mu) * scale + shift).astype(o_ref.dtype)


def layer_norm_4d(x_nchw, gamma, beta, eps: float = 1e-5, max_tile_hw: int = 8192):
    """LayerNormalization4D forward.

    x_nchw: [B, C, H, W]; gamma/beta: [1, C, 1, 1]. Normalizes over C.
    """
    B, C, H, W = x_nchw.shape
    HW = H * W

    # Free reshapes: native NCHW memory layout, no transposes around the kernel.
    x3d = x_nchw.reshape(B, C, HW)
    g3d = gamma.reshape(1, C, 1).astype(jnp.float32)
    b3d = beta.reshape(1, C, 1).astype(jnp.float32)

    itemsize = jnp.dtype(x_nchw.dtype).itemsize
    # Per spatial-column VMEM footprint: 2x double-buffered input + 2x output
    # tiles (I/O dtype) plus f32 working copies (x, result, x*x). Budget kept
    # well under v7x's 64 MiB/core so 2-deep pipelining survives everywhere.
    budget_bytes = 24 << 20
    per_col_bytes = C * (4 * itemsize + 3 * 4)
    max_fit_hw = max(128, budget_bytes // max(per_col_bytes, 1))
    tile_cap = min(max_tile_hw, max_fit_hw)

    if HW <= tile_cap:
        # One full-width spatial tile (full-extent last dim is a valid block
        # dim even if not a 128-multiple). Pack batches to amortize per-step
        # overhead when the per-batch tile is small.
        tile_hw = HW
        hw_pad = HW
        x_in = x3d
        per_b_bytes = max(C * HW * (4 * itemsize + 3 * 4), 1)
        max_tb = max(1, budget_bytes // per_b_bytes)
        tile_b = 1
        for d in range(1, B + 1):
            if B % d == 0 and d <= max_tb:
                tile_b = d
    else:
        tile_b = 1
        tile_hw = max(128, (tile_cap // 128) * 128)        # lane-dense tile
        hw_pad = ((HW + tile_hw - 1) // tile_hw) * tile_hw
        x_in = x3d if hw_pad == HW else jnp.pad(
            x3d, ((0, 0), (0, 0), (0, hw_pad - HW)))       # pad, slice back later

    tile_bytes = tile_b * C * tile_hw * itemsize
    vmem_limit = int(min(max(8 * tile_bytes + (4 << 20), 16 << 20), 40 << 20))

    out3d = pl.pallas_call(
        functools.partial(_ln4d_kernel, eps=eps, inv_c=1.0 / C),
        out_shape=jax.ShapeDtypeStruct((B, C, hw_pad), x_nchw.dtype),
        grid_spec=pltpu.PrefetchScalarGridSpec(
            num_scalar_prefetch=0,
            grid=(B // tile_b, hw_pad // tile_hw),
            in_specs=[
                pl.BlockSpec((tile_b, C, tile_hw), lambda b, s: (b, 0, s)),
                pl.BlockSpec((1, C, 1), lambda b, s: (0, 0, 0)),
                pl.BlockSpec((1, C, 1), lambda b, s: (0, 0, 0)),
            ],
            out_specs=pl.BlockSpec((tile_b, C, tile_hw), lambda b, s: (b, 0, s)),
        ),
        compiler_params=pltpu.CompilerParams(
            dimension_semantics=("parallel", "parallel"),
            vmem_limit_bytes=vmem_limit,
        ),
    )(x_in, g3d, b3d)

    if hw_pad != HW:
        out3d = out3d[:, :, :HW]
    return out3d.reshape(B, C, H, W)


def _reference_ln4d(x, gamma, beta, eps=1e-5):
    mu = jnp.mean(x, axis=1, keepdims=True)
    var = jnp.mean((x - mu) ** 2, axis=1, keepdims=True)
    std = jnp.sqrt(var + eps)
    return (x - mu) / std * gamma + beta


if __name__ == "__main__":
    key = jax.random.PRNGKey(0)
    B, C, H, W = 2, 4, 16, 16
    kx, kg, kb = jax.random.split(key, 3)
    x = jax.random.normal(kx, (B, C, H, W), dtype=jnp.float32)

    # Parameters at module init (nn.init.ones_ / zeros_).
    gamma = jnp.ones((1, C, 1, 1), dtype=jnp.float32)
    beta = jnp.zeros((1, C, 1, 1), dtype=jnp.float32)

    out = layer_norm_4d(x, gamma, beta, eps=1e-5)
    out = jax.block_until_ready(out)
    ref = _reference_ln4d(x, gamma, beta, eps=1e-5)
    assert out.shape == (B, C, H, W)
    assert jnp.allclose(out, ref, atol=2e-5, rtol=2e-5), "mismatch vs reference"

    # Second check with non-trivial affine params (exercises gamma/beta wiring).
    gamma2 = jax.random.normal(kg, (1, C, 1, 1), dtype=jnp.float32)
    beta2 = jax.random.normal(kb, (1, C, 1, 1), dtype=jnp.float32)
    out2 = jax.block_until_ready(layer_norm_4d(x, gamma2, beta2, eps=1e-5))
    ref2 = _reference_ln4d(x, gamma2, beta2, eps=1e-5)
    assert jnp.allclose(out2, ref2, atol=2e-5, rtol=2e-5), "mismatch (affine) vs reference"

    print("KERNEL_OK")
</pallas_src>

<mosaic_0001>
module attributes {stable_mosaic.version = 11 : i64} {
  func.func @_ln4d_kernel(%arg0: i32, %arg1: i32, %arg2: memref<2x4x256xf32, #tpu.memory_space<vmem>>, %arg3: memref<1x4x1xf32, #tpu.memory_space<vmem>>, %arg4: memref<1x4x1xf32, #tpu.memory_space<vmem>>, %arg5: memref<2x4x256xf32, #tpu.memory_space<vmem>>) attributes {dimension_semantics = [#tpu.dimension_semantics<parallel>, #tpu.dimension_semantics<parallel>], iteration_bounds = array<i64: 1, 1>, scalar_prefetch = 0 : i64, scratch_operands = 0 : i64, tpu.core_type = #tpu.core_type<tc>, window_params = [{transform_indices = @transform_0, window_bounds = array<i64: 2, 4, 256>}, {pipeline_mode = #tpu.pipeline_mode<synchronous>, transform_indices = @transform_1, window_bounds = array<i64: 1, 4, 1>}, {pipeline_mode = #tpu.pipeline_mode<synchronous>, transform_indices = @transform_2, window_bounds = array<i64: 1, 4, 1>}, {transform_indices = @transform_3, window_bounds = array<i64: 2, 4, 256>}]} {
    %c0 = arith.constant 0 : index
    %c0_0 = arith.constant 0 : index
    %c0_1 = arith.constant 0 : index
    %0 = vector.load %arg2[%c0, %c0_0, %c0_1] : memref<2x4x256xf32, #tpu.memory_space<vmem>>, vector<2x4x256xf32>
    %cst = arith.constant dense<0.000000e+00> : vector<2x256xf32>
    %1 = vector.multi_reduction <add>, %0, %cst [1] : vector<2x4x256xf32> to vector<2x256xf32>
    %2 = vector.shape_cast %1 : vector<2x256xf32> to vector<2x1x256xf32>
    %3 = arith.mulf %0, %0 : vector<2x4x256xf32>
    %cst_2 = arith.constant dense<0.000000e+00> : vector<2x256xf32>
    %4 = vector.multi_reduction <add>, %3, %cst_2 [1] : vector<2x4x256xf32> to vector<2x256xf32>
    %5 = vector.shape_cast %4 : vector<2x256xf32> to vector<2x1x256xf32>
    %cst_3 = arith.constant 2.500000e-01 : f32
    %6 = vector.broadcast %cst_3 : f32 to vector<2x1x256xf32>
    %7 = arith.mulf %2, %6 : vector<2x1x256xf32>
    %cst_4 = arith.constant 2.500000e-01 : f32
    %8 = vector.broadcast %cst_4 : f32 to vector<2x1x256xf32>
    %9 = arith.mulf %5, %8 : vector<2x1x256xf32>
    %10 = arith.mulf %7, %7 : vector<2x1x256xf32>
    %11 = arith.subf %9, %10 : vector<2x1x256xf32>
    %cst_5 = arith.constant 0.000000e+00 : f32
    %12 = vector.broadcast %cst_5 : f32 to vector<2x1x256xf32>
    %13 = arith.maximumf %11, %12 : vector<2x1x256xf32>
    %cst_6 = arith.constant 9.99999974E-6 : f32
    %14 = vector.broadcast %cst_6 : f32 to vector<2x1x256xf32>
    %15 = arith.addf %13, %14 : vector<2x1x256xf32>
    %16 = math.rsqrt %15 : vector<2x1x256xf32>
    %c0_7 = arith.constant 0 : index
    %c0_8 = arith.constant 0 : index
    %c0_9 = arith.constant 0 : index
    %17 = vector.load %arg3[%c0_7, %c0_8, %c0_9] : memref<1x4x1xf32, #tpu.memory_space<vmem>>, vector<1x4x1xf32>
    %18 = vector.broadcast %16 : vector<2x1x256xf32> to vector<2x4x256xf32>
    %19 = vector.broadcast %17 : vector<1x4x1xf32> to vector<2x4x256xf32>
    %20 = arith.mulf %18, %19 : vector<2x4x256xf32>
    %c0_10 = arith.constant 0 : index
    %c0_11 = arith.constant 0 : index
    %c0_12 = arith.constant 0 : index
    %21 = vector.load %arg4[%c0_10, %c0_11, %c0_12] : memref<1x4x1xf32, #tpu.memory_space<vmem>>, vector<1x4x1xf32>
    %22 = vector.broadcast %7 : vector<2x1x256xf32> to vector<2x4x256xf32>
    %23 = arith.subf %0, %22 : vector<2x4x256xf32>
    %24 = arith.mulf %23, %20 : vector<2x4x256xf32>
    %25 = vector.broadcast %21 : vector<1x4x1xf32> to vector<2x4x256xf32>
    %26 = arith.addf %24, %25 : vector<2x4x256xf32>
    %c0_13 = arith.constant 0 : index
    %c0_14 = arith.constant 0 : index
    %c0_15 = arith.constant 0 : index
    %27 = vector.load %arg5[%c0_13, %c0_14, %c0_15] : memref<2x4x256xf32, #tpu.memory_space<vmem>>, vector<2x4x256xf32>
    tpu.vector_store %arg5[%c0_13, %c0_14, %c0_15], %26 {strides = array<i32>} : memref<2x4x256xf32, #tpu.memory_space<vmem>>, vector<2x4x256xf32>,
    return
  }
  func.func @transform_0(%arg0: i32, %arg1: i32) -> (i32, i32, i32) {
    %c0_i32 = arith.constant 0 : i32
    %c0_i32_0 = arith.constant 0 : i32
    return %arg0, %c0_i32, %arg1 : i32, i32, i32
  }
  func.func @transform_1(%arg0: i32, %arg1: i32) -> (i32, i32, i32) {
    %c0_i32 = arith.constant 0 : i32
    %c0_i32_0 = arith.constant 0 : i32
    %c0_i32_1 = arith.constant 0 : i32
    %c0_i32_2 = arith.constant 0 : i32
    return %c0_i32, %c0_i32_0, %c0_i32_1 : i32, i32, i32
  }
  func.func @transform_2(%arg0: i32, %arg1: i32) -> (i32, i32, i32) {
    %c0_i32 = arith.constant 0 : i32
    %c0_i32_0 = arith.constant 0 : i32
    %c0_i32_1 = arith.constant 0 : i32
    %c0_i32_2 = arith.constant 0 : i32
    return %c0_i32, %c0_i32_0, %c0_i32_1 : i32, i32, i32
  }
  func.func @transform_3(%arg0: i32, %arg1: i32) -> (i32, i32, i32) {
    %c0_i32 = arith.constant 0 : i32
    %c0_i32_0 = arith.constant 0 : i32
    return %arg0, %c0_i32, %arg1 : i32, i32, i32
  }
}

</mosaic_0001>

<llo_original>
// kernel: tpu_custom_call.1
$region0: #{tpu_custom_call.1}
  #allocation0 [shape = 'u32[]', space=smem, size = 0x4, offset = 0x4, fixed_abs, tag = 'smem constant byte address 0x4 - core index']
  #allocation1 [shape = 'u32[144,128]{1,0:T(1,128)}', space=vmem, size = 0x12000, scoped, tag = 'internal scratch']
  %s0 = inlined_call_operand.hbm [shape: f32[2,4,256], index: 0, kind: input, shape index: {}]
  %s1 = inlined_call_operand.vmem [shape: f32[1,4,1], index: 1, kind: input, shape index: {}]
  %s2 = inlined_call_operand.vmem [shape: f32[1,4,1], index: 2, kind: input, shape index: {}]
  %s3 = inlined_call_operand.hbm [shape: f32[2,4,256], index: 3, kind: output, shape index: {}]
  %s4 = sld [smem:[#allocation0]]
  $region26: #{tpu_custom_call.1} parent=0
    _
  %s6 = ssub.s32 1, %s4
  %s7 = scalar_select 0, %s6, %s4
  $region1: #{tpu_custom_call.1} parent=0
    #allocation2 [shape = 'u8[8192]{0}', space=vmem, size = 0x2000, scoped, tag = 'input window, operand 0, single buffered']
    #allocation3 [shape = 's32[1]{0}', space=sflag, size = 0x4, scoped, tag = 'scoped memory for tpu_custom_call.1']
    #allocation4 [shape = 's32[1]{0}', space=sflag, size = 0x4, scoped, tag = 'scoped memory for tpu_custom_call.1']
    #allocation5 [shape = 'u8[8192]{0}', space=vmem, size = 0x2000, scoped, tag = 'output window, operand 0, single buffered']
    %8 = vsyncpa [#allocation3], 0
    %9 = vsyncpa [#allocation4], 0
    // Predicated region
    $region2: #{tpu_custom_call.1} parent=1 // pred_check
      _
    $region3: #{tpu_custom_call.1} parent=1 // pred_check_branch
      %11 = sbr.rel (0) target = $region5
    $region4: #{tpu_custom_call.1} parent=1 // pred_region
      %s13 = ssub.s32 256, 256
      %14 = vsyncadd [#allocation3], %s13
      %s15 = sshll.u32 [#allocation2], 4
      %s16 = int_to_ptr.vmem [resolvable:$true] %s15
      %21 = dma.hbm_to_vmem [thread:$0]  %s0, 256, %s16, [#allocation3], 128, 128, 8
    $region5: #{tpu_custom_call.1} parent=1 // pred_fallthru
      _
    // Predicated region
    $region6: #{tpu_custom_call.1} parent=1 // pred_check
      _
    $region7: #{tpu_custom_call.1} parent=1 // pred_check_branch
      %23 = sbr.rel (0) target = $region9
    $region8: #{tpu_custom_call.1} parent=1 // pred_region
      _
    $region9: #{tpu_custom_call.1} parent=1 // pred_fallthru
      _
    // Predicated region
    $region10: #{tpu_custom_call.1} parent=1 // pred_check
      _
    $region11: #{tpu_custom_call.1} parent=1 // pred_check_branch
      %25 = sbr.rel (0) target = $region13
    $region12: #{tpu_custom_call.1} parent=1 // pred_region
      _
    $region13: #{tpu_custom_call.1} parent=1 // pred_fallthru
      _
    // Predicated region
    $region14: #{tpu_custom_call.1} parent=1 // pred_check
      _
    $region15: #{tpu_custom_call.1} parent=1 // pred_check_branch
      %27 = sbr.rel (0) target = $region17
    $region16: #{tpu_custom_call.1} parent=1 // pred_region
      %28 = dma.done [#allocation3], 256
    $region17: #{tpu_custom_call.1} parent=1 // pred_fallthru
      _
    %v29 = vld [vmem:[#allocation2] sm:$0xff]
    %v30 = vld [vmem:[#allocation2 + $0x8] sm:$0xff]
    %v33 = vcombine.high %v29, %v29
    %v34 = vcombine.high %v30, %v30
    %vm37 = vcmask 1043456
    %v38 = vsel %vm37, %v29, 0.0
    %v39 = vrot.slane %v38, 4
    %v40 = vadd.f32 %v38, %v39
    %v41 = vrot.slane %v40, 2
    %v42 = vadd.f32 %v40, %v41
    %v43 = vrot.slane %v42, 1
    %v44 = vadd.f32 %v42, %v43
    %v45 = vsel %vm37, %v33, 0.0
    %v46 = vrot.slane %v45, 4
    %v47 = vadd.f32 %v45, %v46
    %v48 = vrot.slane %v47, 2
    %v49 = vadd.f32 %v47, %v48
    %v50 = vrot.slane %v49, 1
    %v51 = vadd.f32 %v49, %v50
    %v52 = vsel %vm37, %v30, 0.0
    %v53 = vrot.slane %v52, 4
    %v54 = vadd.f32 %v52, %v53
    %v55 = vrot.slane %v54, 2
    %v56 = vadd.f32 %v54, %v55
    %v57 = vrot.slane %v56, 1
    %v58 = vadd.f32 %v56, %v57
    %v59 = vsel %vm37, %v34, 0.0
    %v60 = vrot.slane %v59, 4
    %v61 = vadd.f32 %v59, %v60
    %v62 = vrot.slane %v61, 2
    %v63 = vadd.f32 %v61, %v62
    %v64 = vrot.slane %v63, 1
    %v65 = vadd.f32 %v63, %v64
    %v66 = vmul.f32 %v29, %v29
    %v67 = vmul.f32 %v30, %v30
    %v70 = vcombine.high %v66, %v66
    %v71 = vcombine.high %v67, %v67
    %v74 = vsel %vm37, %v66, 0.0
    %v75 = vrot.slane %v74, 4
    %v76 = vadd.f32 %v74, %v75
    %v77 = vrot.slane %v76, 2
    %v78 = vadd.f32 %v76, %v77
    %v79 = vrot.slane %v78, 1
    %v80 = vadd.f32 %v78, %v79
    %v81 = vsel %vm37, %v70, 0.0
    %v82 = vrot.slane %v81, 4
    %v83 = vadd.f32 %v81, %v82
    %v84 = vrot.slane %v83, 2
    %v85 = vadd.f32 %v83, %v84
    %v86 = vrot.slane %v85, 1
    %v87 = vadd.f32 %v85, %v86
    %v88 = vsel %vm37, %v67, 0.0
    %v89 = vrot.slane %v88, 4
    %v90 = vadd.f32 %v88, %v89
    %v91 = vrot.slane %v90, 2
    %v92 = vadd.f32 %v90, %v91
    %v93 = vrot.slane %v92, 1
    %v94 = vadd.f32 %v92, %v93
    %v95 = vsel %vm37, %v71, 0.0
    %v96 = vrot.slane %v95, 4
    %v97 = vadd.f32 %v95, %v96
    %v98 = vrot.slane %v97, 2
    %v99 = vadd.f32 %v97, %v98
    %v100 = vrot.slane %v99, 1
    %v101 = vadd.f32 %v99, %v100
    %v102 = vmul.f32 %v44, 0.25
    %v103 = vmul.f32 %v51, 0.25
    %v104 = vmul.f32 %v58, 0.25
    %v105 = vmul.f32 %v65, 0.25
    %v106 = vmul.f32 %v80, 0.25
    %v107 = vmul.f32 %v87, 0.25
    %v108 = vmul.f32 %v94, 0.25
    %v109 = vmul.f32 %v101, 0.25
    %v110 = vmul.f32 %v102, %v102
    %v111 = vmul.f32 %v103, %v103
    %v112 = vmul.f32 %v104, %v104
    %v113 = vmul.f32 %v105, %v105
    %v114 = vsub.f32 %v106, %v110
    %v115 = vsub.f32 %v107, %v111
    %v116 = vsub.f32 %v108, %v112
    %v117 = vsub.f32 %v109, %v113
    %v118 = vmax.f32 %v114, 0.0
    %v119 = vmax.f32 %v115, 0.0
    %v120 = vmax.f32 %v116, 0.0
    %v121 = vmax.f32 %v117, 0.0
    %v122 = vadd.f32 %v118, 1e-05
    %v123 = vadd.f32 %v119, 1e-05
    %v124 = vadd.f32 %v120, 1e-05
    %v125 = vadd.f32 %v121, 1e-05
    %v126 = vrsqrt.pop %v122
    %v127 = vrsqrt.pop %v123
    %v128 = vrsqrt.pop %v124
    %v129 = vrsqrt.pop %v125
    %v130 = vld [vmem:[%s1] sm:$0xf]
    %132 = vset.pattern.permute.xlu0 0
    %133 = vperm.xlu0 %132, %v130
    %v134 = vpop.permute.xlu0 %133
    %v136 = vmul.f32 %v126, %v134
    %v137 = vmul.f32 %v127, %v134
    %v138 = vmul.f32 %v128, %v134
    %v139 = vmul.f32 %v129, %v134
    %v140 = vld [vmem:[%s2] sm:$0xf]
    %v145 = vcombine.low %v102, %v103
    %v146 = vcombine.low %v104, %v105
    %v149 = vsub.f32 %v29, %v145
    %v150 = vsub.f32 %v30, %v146
    %v155 = vcombine.low %v136, %v137
    %v156 = vcombine.low %v138, %v139
    %v159 = vmul.f32 %v149, %v155
    %v160 = vmul.f32 %v150, %v156
    %162 = vset.pattern.permute.xlu0 0
    %163 = vperm.xlu0 %162, %v140
    %v164 = vpop.permute.xlu0 %163
    %v166 = vunpack.c.l.s4 839922192
    %v167 = vunpack.c.0.s8 %v166
    %v168 = vlaneseq
    %v169 = vshrl.u32 %v168, 7
    %v170 = vsub.s32 %v167, %v169
    %v171 = vrot.slane %v164, %v170
    %v173 = vadd.f32 %v159, %v171
    %v174 = vadd.f32 %v160, %v171
    %175 = vst [vmem:[#allocation5] sm:$0xff] %v173
    %176 = vst [vmem:[#allocation5 + $0x8] sm:$0xff] %v174
    // Predicated region
    $region18: #{tpu_custom_call.1} parent=1 // pred_check
      _
    $region19: #{tpu_custom_call.1} parent=1 // pred_check_branch
      %178 = sbr.rel (0) target = $region21
    $region20: #{tpu_custom_call.1} parent=1 // pred_region
      %s180 = ssub.s32 256, 256
      %181 = vsyncadd [#allocation4], %s180
      %s182 = sshll.u32 [#allocation5], 4
      %s183 = int_to_ptr.vmem [resolvable:$true] %s182
      %188 = dma.vmem_to_hbm [thread:$0]  %s183, 256, %s3, [#allocation4], 128, 128, 8
    $region21: #{tpu_custom_call.1} parent=1 // pred_fallthru
      _
    // Predicated region
    $region22: #{tpu_custom_call.1} parent=1 // pred_check
      _
    $region23: #{tpu_custom_call.1} parent=1 // pred_check_branch
      %190 = sbr.rel (0) target = $region25
    $region24: #{tpu_custom_call.1} parent=1 // pred_region
      %191 = dma.done [#allocation4], 256
    $region25: #{tpu_custom_call.1} parent=1 // pred_fallthru
      _
    %192 = vsyncpa [#allocation3], 1
    %193 = vsyncpa [#allocation4], 1

</llo_original>
